<compile_context>
chip_gen: v7x
topology: tpu7x:2x2x1
jax: 0.10.0
libtpu: 0.0.40
codegen_flags: <defaults>
</compile_context>

<pallas_src>
import functools

import jax
import jax.numpy as jnp
from jax.experimental import pallas as pl
from jax.experimental.pallas import tpu as pltpu

HIDDEN_CHANNELS = 128
NUM_LAYERS = 4
LANE = 128                     # hidden dim maps exactly onto the TPU lane width
DIN_PAD = 16                   # real Din is 6..10 -> pad to 16, not 128
ROW_TILE_MAX = 1024            # sweep 512/1024/2048 per generation; 1024 default
COMPUTE_DTYPE = jnp.bfloat16   # MXU input dtype (accumulation stays f32)
OUT_DTYPE = jnp.bfloat16       # kernel output dtype (dominant HBM stream)


def _round_up(x, m):
    return ((x + m - 1) // m) * m


def _pad2d(x, rows, cols):
    return jnp.pad(x, ((0, rows - x.shape[0]), (0, cols - x.shape[1])))


# ---------------------------------------------------------------------------
# Fused 4-layer MLP kernel.  One grid step = one (tm, *) row tile of the
# concatenated [edges; nodes; globals] matrix; the index maps select which of
# the three stacked weight sets to use from the (static) tile->segment layout.
# ---------------------------------------------------------------------------
def _mlp4_kernel(x_ref,
                 w1_ref, b1_ref, w2_ref, b2_ref,
                 w3_ref, b3_ref, w4_ref, b4_ref,
                 o_ref):
    cdt = w1_ref.dtype  # bf16 matmul inputs, f32 accumulation
    h = jnp.dot(x_ref[...], w1_ref[0], preferred_element_type=jnp.float32)
    h = jnp.maximum(h + b1_ref[0], 0.0)
    h = jnp.dot(h.astype(cdt), w2_ref[0], preferred_element_type=jnp.float32)
    h = jnp.maximum(h + b2_ref[0], 0.0)
    h = jnp.dot(h.astype(cdt), w3_ref[0], preferred_element_type=jnp.float32)
    h = jnp.maximum(h + b3_ref[0], 0.0)
    out = jnp.dot(h.astype(cdt), w4_ref[0], preferred_element_type=jnp.float32)
    o_ref[...] = (out + b4_ref[0]).astype(o_ref.dtype)


def _fused_forward(edges, nodes, globals_, packed, dout_sizes, tm_max):
    """Run the three independent MLPs behind a single pallas_call."""
    W1, B1, W2, B2, W3, B3, W4, B4 = packed
    segments = (edges, nodes, globals_)
    n_seg = len(segments)

    # Row tile: large for DMA/MXU efficiency and fewer ~0.35us grid-step
    # overheads, but capped so that
    #   * the largest segment spans >=2 tiles (v7x: keeps the "parallel" axis
    #     splittable across both TensorCores), and
    #   * tiny inputs are not inflated.
    max_rows = max(s.shape[0] for s in segments)
    tm = min(tm_max, max(16, _round_up(-(-max_rows // 2), 16)))

    tiles = [pl.cdiv(s.shape[0], tm) for s in segments]
    n_tiles = sum(tiles)
    total_rows = n_tiles * tm
    seg_start1 = tiles[0]
    seg_start2 = tiles[0] + tiles[1]

    xs, row_offsets = [], []
    off = 0
    for s, t in zip(segments, tiles):
        row_offsets.append(off)
        xs.append(_pad2d(s, t * tm, DIN_PAD).astype(COMPUTE_DTYPE))
        off += t * tm
    x_all = jnp.concatenate(xs, axis=0)              # (total_rows, 16) bf16

    # Segment id is a pure function of the grid index (tiles grouped per
    # segment), so no scalar prefetch is needed.
    def _seg(i, s1=seg_start1, s2=seg_start2):
        return (i >= s1).astype(jnp.int32) + (i >= s2).astype(jnp.int32)

    row_map = lambda i: (i, 0)                 # lane-dense row tiles
    sel_map = lambda i: (_seg(i), 0, 0)        # per-segment weight selection

    # Weight block index changes only at the two segment boundaries, so the
    # pipeliner keeps these blocks resident between boundaries.
    w1_spec = pl.BlockSpec((1, DIN_PAD, LANE), sel_map)
    w_spec = pl.BlockSpec((1, LANE, LANE), sel_map)
    b_spec = pl.BlockSpec((1, 1, LANE), sel_map)

    flops = 2 * total_rows * (DIN_PAD * LANE + (NUM_LAYERS - 1) * LANE * LANE)
    bytes_accessed = (
        total_rows * DIN_PAD * jnp.dtype(COMPUTE_DTYPE).itemsize     # x in
        + total_rows * LANE * jnp.dtype(OUT_DTYPE).itemsize          # out
        + n_seg * (DIN_PAD + (NUM_LAYERS - 1) * LANE) * LANE
            * jnp.dtype(COMPUTE_DTYPE).itemsize                      # weights
        + n_seg * NUM_LAYERS * LANE * 4)                             # biases f32

    out = pl.pallas_call(
        _mlp4_kernel,
        out_shape=jax.ShapeDtypeStruct((total_rows, LANE), OUT_DTYPE),
        grid=(n_tiles,),
        in_specs=[
            pl.BlockSpec((tm, DIN_PAD), row_map),
            w1_spec, b_spec, w_spec, b_spec,
            w_spec, b_spec, w_spec, b_spec,
        ],
        out_specs=pl.BlockSpec((tm, LANE), row_map),
        compiler_params=pltpu.CompilerParams(
            dimension_semantics=("parallel",),          # shards across v7x's 2 TCs
            vmem_limit_bytes=16 * 1024 * 1024),
        cost_estimate=pl.CostEstimate(
            flops=int(flops), transcendentals=0,
            bytes_accessed=int(bytes_accessed)),
    )(x_all, W1, B1, W2, B2, W3, B3, W4, B4)

    # Row/lane slice + cast back to f32 (single fused XLA op per segment).
    results = []
    for s, off, dout in zip(segments, row_offsets, dout_sizes):
        results.append(out[off:off + s.shape[0], :dout].astype(jnp.float32))
    return tuple(results)


_fused_forward_jit = jax.jit(_fused_forward,
                             static_argnames=("dout_sizes", "tm_max"))


# ---------------------------------------------------------------------------
# Parameter construction / packing.
# ---------------------------------------------------------------------------
def init_mlp4_params(key, d_in, d_out, hidden=HIDDEN_CHANNELS):
    """Deterministic init of a 4-layer MLP (PyTorch-Linear-like uniform init)."""
    dims = [d_in, hidden, hidden, hidden, d_out]
    params = []
    for li in range(NUM_LAYERS):
        key, kw, kb = jax.random.split(key, 3)
        bound = 1.0 / float(dims[li]) ** 0.5
        w = jax.random.uniform(kw, (dims[li], dims[li + 1]), jnp.float32,
                               minval=-bound, maxval=bound)
        b = jax.random.uniform(kb, (1, dims[li + 1]), jnp.float32,
                               minval=-bound, maxval=bound)
        params += [w, b]
    return tuple(params)


def pack_mlp_params(param_sets, compute_dtype=COMPUTE_DTYPE):
    """Zero-pad layers (Din->16, hidden/out->128) and stack the 3 MLPs.

    Weights -> bf16 (MXU inputs); biases stay f32 (elementwise path)."""
    stacked = []
    for layer in range(NUM_LAYERS):
        k_pad = DIN_PAD if layer == 0 else LANE
        ws = [_pad2d(p[2 * layer], k_pad, LANE).astype(compute_dtype)
              for p in param_sets]
        bs = [_pad2d(p[2 * layer + 1], 1, LANE) for p in param_sets]
        stacked.append(jnp.stack(ws))   # (3, k_pad, 128)
        stacked.append(jnp.stack(bs))   # (3, 1, 128)
    return tuple(stacked)               # (W1, B1, W2, B2, W3, B3, W4, B4)


class MLPGraphIndependentPallas:
    """GraphIndependent: apply edge / node / global MLPs independently."""

    def __init__(self, key, edge_in, node_in, global_in,
                 edge_output_size, node_output_size):
        assert max(edge_in, node_in, global_in) <= DIN_PAD, "raise DIN_PAD"
        ke, kn, kg = jax.random.split(key, 3)
        self.edge_params = init_mlp4_params(ke, edge_in, edge_output_size)
        self.node_params = init_mlp4_params(kn, node_in, node_output_size)
        # NOTE: source module passes node_output_size to the global model too.
        self.global_params = init_mlp4_params(kg, global_in, node_output_size)
        self._packed = pack_mlp_params(
            (self.edge_params, self.node_params, self.global_params))
        self._dout = (edge_output_size, node_output_size, node_output_size)

    def __call__(self, edges, nodes, globals_, tm_max=ROW_TILE_MAX):
        e, n, g = _fused_forward_jit(edges, nodes, globals_, self._packed,
                                     dout_sizes=self._dout, tm_max=tm_max)
        return {"edges": e, "nodes": n, "globals": g}


# ---------------------------------------------------------------------------
# Pure-JAX references for correctness checking.
# ---------------------------------------------------------------------------
def _mlp4_ref(x, params, compute_dtype=None):
    w1, b1, w2, b2, w3, b3, w4, b4 = params
    cast = (lambda a: a.astype(compute_dtype)) if compute_dtype is not None else (lambda a: a)
    h = jnp.maximum(jnp.dot(cast(x), cast(w1), preferred_element_type=jnp.float32) + b1, 0.0)
    h = jnp.maximum(jnp.dot(cast(h), cast(w2), preferred_element_type=jnp.float32) + b2, 0.0)
    h = jnp.maximum(jnp.dot(cast(h), cast(w3), preferred_element_type=jnp.float32) + b3, 0.0)
    return jnp.dot(cast(h), cast(w4), preferred_element_type=jnp.float32) + b4


if __name__ == "__main__":
    key = jax.random.PRNGKey(0)
    k_param, k_e, k_n, k_g = jax.random.split(key, 4)

    # Small synthetic graph: 16 edges (8 feats), 12 nodes (10 feats), 2 globals (6 feats).
    num_edges, edge_in = 16, 8
    num_nodes, node_in = 12, 10
    num_graphs, global_in = 2, 6
    edge_output_size, node_output_size = 3, 4

    edges = jax.random.normal(k_e, (num_edges, edge_in), jnp.float32)
    nodes = jax.random.normal(k_n, (num_nodes, node_in), jnp.float32)
    globals_ = jax.random.normal(k_g, (num_graphs, global_in), jnp.float32)

    model = MLPGraphIndependentPallas(
        k_param, edge_in, node_in, global_in,
        edge_output_size, node_output_size)

    out = model(edges, nodes, globals_)
    jax.block_until_ready(out)

    inputs = {"edges": edges, "nodes": nodes, "globals": globals_}
    params = {"edges": model.edge_params, "nodes": model.node_params,
              "globals": model.global_params}
    for k in out:
        # Apples-to-apples reference: bf16 matmul inputs, f32 accumulation,
        # final result rounded to bf16 like the kernel's output store.
        ref_bf16 = _mlp4_ref(inputs[k], params[k], compute_dtype=COMPUTE_DTYPE)
        ref_bf16 = ref_bf16.astype(OUT_DTYPE).astype(jnp.float32)
        assert out[k].shape == ref_bf16.shape, (k, out[k].shape, ref_bf16.shape)
        assert jnp.allclose(out[k], ref_bf16, atol=2e-2, rtol=2e-2), k
        # Loose sanity check vs. the full-f32 formula (bf16 path ~1e-2 rel).
        ref_f32 = _mlp4_ref(inputs[k], params[k])
        assert jnp.allclose(out[k], ref_f32, atol=1.5e-1, rtol=1.5e-1), k

    print("KERNEL_OK")
</pallas_src>

<mosaic_0001>
module attributes {stable_mosaic.version = 11 : i64} {
  func.func @_mlp4_kernel(%arg0: i32, %arg1: memref<16x16xbf16, #tpu.memory_space<vmem>>, %arg2: memref<1x16x128xbf16, #tpu.memory_space<vmem>>, %arg3: memref<1x1x128xf32, #tpu.memory_space<vmem>>, %arg4: memref<1x128x128xbf16, #tpu.memory_space<vmem>>, %arg5: memref<1x1x128xf32, #tpu.memory_space<vmem>>, %arg6: memref<1x128x128xbf16, #tpu.memory_space<vmem>>, %arg7: memref<1x1x128xf32, #tpu.memory_space<vmem>>, %arg8: memref<1x128x128xbf16, #tpu.memory_space<vmem>>, %arg9: memref<1x1x128xf32, #tpu.memory_space<vmem>>, %arg10: memref<16x128xbf16, #tpu.memory_space<vmem>>) attributes {dimension_semantics = [#tpu.dimension_semantics<parallel>], iteration_bounds = array<i64: 3>, scalar_prefetch = 0 : i64, scratch_operands = 0 : i64, tpu.core_type = #tpu.core_type<tc>, window_params = [{transform_indices = @transform_0, window_bounds = array<i64: 16, 16>}, {transform_indices = @transform_1, window_bounds = array<i64: 1, 16, 128>}, {transform_indices = @transform_2, window_bounds = array<i64: 1, 1, 128>}, {transform_indices = @transform_3, window_bounds = array<i64: 1, 128, 128>}, {transform_indices = @transform_4, window_bounds = array<i64: 1, 1, 128>}, {transform_indices = @transform_5, window_bounds = array<i64: 1, 128, 128>}, {transform_indices = @transform_6, window_bounds = array<i64: 1, 1, 128>}, {transform_indices = @transform_7, window_bounds = array<i64: 1, 128, 128>}, {transform_indices = @transform_8, window_bounds = array<i64: 1, 1, 128>}, {transform_indices = @transform_9, window_bounds = array<i64: 16, 128>}]} {
    %c0 = arith.constant 0 : index
    %c0_0 = arith.constant 0 : index
    %0 = vector.load %arg1[%c0, %c0_0] : memref<16x16xbf16, #tpu.memory_space<vmem>>, vector<16x16xbf16>
    %c0_1 = arith.constant 0 : index
    %c0_2 = arith.constant 0 : index
    %c0_3 = arith.constant 0 : index
    %1 = vector.load %arg2[%c0_1, %c0_2, %c0_3] : memref<1x16x128xbf16, #tpu.memory_space<vmem>>, vector<1x16x128xbf16>
    %2 = vector.shape_cast %1 : vector<1x16x128xbf16> to vector<16x128xbf16>
    %cst = arith.constant dense<0.000000e+00> : vector<16x128xf32>
    %3 = tpu.matmul %0, %2, %cst {dimension_numbers = #tpu.dot_dimension_numbers<[1], [0], [0], [1], [0, 0, 1, 1], [], []>} : vector<16x16xbf16>, vector<16x128xbf16>, vector<16x128xf32> -> vector<16x128xf32>
    %c0_4 = arith.constant 0 : index
    %c0_5 = arith.constant 0 : index
    %c0_6 = arith.constant 0 : index
    %4 = vector.load %arg3[%c0_4, %c0_5, %c0_6] : memref<1x1x128xf32, #tpu.memory_space<vmem>>, vector<1x1x128xf32>
    %5 = vector.shape_cast %4 : vector<1x1x128xf32> to vector<1x128xf32>
    %6 = vector.broadcast %5 : vector<1x128xf32> to vector<16x128xf32>
    %7 = arith.addf %3, %6 : vector<16x128xf32>
    %cst_7 = arith.constant 0.000000e+00 : f32
    %8 = vector.broadcast %cst_7 : f32 to vector<16x128xf32>
    %9 = arith.maximumf %7, %8 : vector<16x128xf32>
    %10 = arith.truncf %9 : vector<16x128xf32> to vector<16x128xbf16>
    %c0_8 = arith.constant 0 : index
    %c0_9 = arith.constant 0 : index
    %c0_10 = arith.constant 0 : index
    %11 = vector.load %arg4[%c0_8, %c0_9, %c0_10] : memref<1x128x128xbf16, #tpu.memory_space<vmem>>, vector<1x128x128xbf16>
    %12 = vector.shape_cast %11 : vector<1x128x128xbf16> to vector<128x128xbf16>
    %cst_11 = arith.constant dense<0.000000e+00> : vector<16x128xf32>
    %13 = tpu.matmul %10, %12, %cst_11 {dimension_numbers = #tpu.dot_dimension_numbers<[1], [0], [0], [1], [0, 0, 1, 1], [], []>} : vector<16x128xbf16>, vector<128x128xbf16>, vector<16x128xf32> -> vector<16x128xf32>
    %c0_12 = arith.constant 0 : index
    %c0_13 = arith.constant 0 : index
    %c0_14 = arith.constant 0 : index
    %14 = vector.load %arg5[%c0_12, %c0_13, %c0_14] : memref<1x1x128xf32, #tpu.memory_space<vmem>>, vector<1x1x128xf32>
    %15 = vector.shape_cast %14 : vector<1x1x128xf32> to vector<1x128xf32>
    %16 = vector.broadcast %15 : vector<1x128xf32> to vector<16x128xf32>
    %17 = arith.addf %13, %16 : vector<16x128xf32>
    %cst_15 = arith.constant 0.000000e+00 : f32
    %18 = vector.broadcast %cst_15 : f32 to vector<16x128xf32>
    %19 = arith.maximumf %17, %18 : vector<16x128xf32>
    %20 = arith.truncf %19 : vector<16x128xf32> to vector<16x128xbf16>
    %c0_16 = arith.constant 0 : index
    %c0_17 = arith.constant 0 : index
    %c0_18 = arith.constant 0 : index
    %21 = vector.load %arg6[%c0_16, %c0_17, %c0_18] : memref<1x128x128xbf16, #tpu.memory_space<vmem>>, vector<1x128x128xbf16>
    %22 = vector.shape_cast %21 : vector<1x128x128xbf16> to vector<128x128xbf16>
    %cst_19 = arith.constant dense<0.000000e+00> : vector<16x128xf32>
    %23 = tpu.matmul %20, %22, %cst_19 {dimension_numbers = #tpu.dot_dimension_numbers<[1], [0], [0], [1], [0, 0, 1, 1], [], []>} : vector<16x128xbf16>, vector<128x128xbf16>, vector<16x128xf32> -> vector<16x128xf32>
    %c0_20 = arith.constant 0 : index
    %c0_21 = arith.constant 0 : index
    %c0_22 = arith.constant 0 : index
    %24 = vector.load %arg7[%c0_20, %c0_21, %c0_22] : memref<1x1x128xf32, #tpu.memory_space<vmem>>, vector<1x1x128xf32>
    %25 = vector.shape_cast %24 : vector<1x1x128xf32> to vector<1x128xf32>
    %26 = vector.broadcast %25 : vector<1x128xf32> to vector<16x128xf32>
    %27 = arith.addf %23, %26 : vector<16x128xf32>
    %cst_23 = arith.constant 0.000000e+00 : f32
    %28 = vector.broadcast %cst_23 : f32 to vector<16x128xf32>
    %29 = arith.maximumf %27, %28 : vector<16x128xf32>
    %30 = arith.truncf %29 : vector<16x128xf32> to vector<16x128xbf16>
    %c0_24 = arith.constant 0 : index
    %c0_25 = arith.constant 0 : index
    %c0_26 = arith.constant 0 : index
    %31 = vector.load %arg8[%c0_24, %c0_25, %c0_26] : memref<1x128x128xbf16, #tpu.memory_space<vmem>>, vector<1x128x128xbf16>
    %32 = vector.shape_cast %31 : vector<1x128x128xbf16> to vector<128x128xbf16>
    %cst_27 = arith.constant dense<0.000000e+00> : vector<16x128xf32>
    %33 = tpu.matmul %30, %32, %cst_27 {dimension_numbers = #tpu.dot_dimension_numbers<[1], [0], [0], [1], [0, 0, 1, 1], [], []>} : vector<16x128xbf16>, vector<128x128xbf16>, vector<16x128xf32> -> vector<16x128xf32>
    %c0_28 = arith.constant 0 : index
    %c0_29 = arith.constant 0 : index
    %c0_30 = arith.constant 0 : index
    %34 = vector.load %arg9[%c0_28, %c0_29, %c0_30] : memref<1x1x128xf32, #tpu.memory_space<vmem>>, vector<1x1x128xf32>
    %35 = vector.shape_cast %34 : vector<1x1x128xf32> to vector<1x128xf32>
    %36 = vector.broadcast %35 : vector<1x128xf32> to vector<16x128xf32>
    %37 = arith.addf %33, %36 : vector<16x128xf32>
    %38 = arith.truncf %37 : vector<16x128xf32> to vector<16x128xbf16>
    %c0_31 = arith.constant 0 : index
    %c0_32 = arith.constant 0 : index
    %39 = vector.load %arg10[%c0_31, %c0_32] : memref<16x128xbf16, #tpu.memory_space<vmem>>, vector<16x128xbf16>
    tpu.vector_store %arg10[%c0_31, %c0_32], %38 {strides = array<i32>} : memref<16x128xbf16, #tpu.memory_space<vmem>>, vector<16x128xbf16>,
    return
  }
  func.func @transform_0(%arg0: i32) -> (i32, i32) {
    %c0_i32 = arith.constant 0 : i32
    %c0_i32_0 = arith.constant 0 : i32
    return %arg0, %c0_i32 : i32, i32
  }
  func.func @transform_1(%arg0: i32) -> (i32, i32, i32) {
    %c1_i32 = arith.constant 1 : i32
    %0 = arith.cmpi sge, %arg0, %c1_i32 : i32
    %1 = arith.extui %0 : i1 to i32
    %c2_i32 = arith.constant 2 : i32
    %2 = arith.cmpi sge, %arg0, %c2_i32 : i32
    %3 = arith.extui %2 : i1 to i32
    %4 = arith.addi %1, %3 : i32
    %c0_i32 = arith.constant 0 : i32
    %c0_i32_0 = arith.constant 0 : i32
    %c0_i32_1 = arith.constant 0 : i32
    return %4, %c0_i32, %c0_i32_0 : i32, i32, i32
  }
  func.func @transform_2(%arg0: i32) -> (i32, i32, i32) {
    %c1_i32 = arith.constant 1 : i32
    %0 = arith.cmpi sge, %arg0, %c1_i32 : i32
    %1 = arith.extui %0 : i1 to i32
    %c2_i32 = arith.constant 2 : i32
    %2 = arith.cmpi sge, %arg0, %c2_i32 : i32
    %3 = arith.extui %2 : i1 to i32
    %4 = arith.addi %1, %3 : i32
    %c0_i32 = arith.constant 0 : i32
    %c0_i32_0 = arith.constant 0 : i32
    %c0_i32_1 = arith.constant 0 : i32
    return %4, %c0_i32, %c0_i32_0 : i32, i32, i32
  }
  func.func @transform_3(%arg0: i32) -> (i32, i32, i32) {
    %c1_i32 = arith.constant 1 : i32
    %0 = arith.cmpi sge, %arg0, %c1_i32 : i32
    %1 = arith.extui %0 : i1 to i32
    %c2_i32 = arith.constant 2 : i32
    %2 = arith.cmpi sge, %arg0, %c2_i32 : i32
    %3 = arith.extui %2 : i1 to i32
    %4 = arith.addi %1, %3 : i32
    %c0_i32 = arith.constant 0 : i32
    %c0_i32_0 = arith.constant 0 : i32
    %c0_i32_1 = arith.constant 0 : i32
    return %4, %c0_i32, %c0_i32_0 : i32, i32, i32
  }
  func.func @transform_4(%arg0: i32) -> (i32, i32, i32) {
    %c1_i32 = arith.constant 1 : i32
    %0 = arith.cmpi sge, %arg0, %c1_i32 : i32
    %1 = arith.extui %0 : i1 to i32
    %c2_i32 = arith.constant 2 : i32
    %2 = arith.cmpi sge, %arg0, %c2_i32 : i32
    %3 = arith.extui %2 : i1 to i32
    %4 = arith.addi %1, %3 : i32
    %c0_i32 = arith.constant 0 : i32
    %c0_i32_0 = arith.constant 0 : i32
    %c0_i32_1 = arith.constant 0 : i32
    return %4, %c0_i32, %c0_i32_0 : i32, i32, i32
  }
  func.func @transform_5(%arg0: i32) -> (i32, i32, i32) {
    %c1_i32 = arith.constant 1 : i32
    %0 = arith.cmpi sge, %arg0, %c1_i32 : i32
    %1 = arith.extui %0 : i1 to i32
    %c2_i32 = arith.constant 2 : i32
    %2 = arith.cmpi sge, %arg0, %c2_i32 : i32
    %3 = arith.extui %2 : i1 to i32
    %4 = arith.addi %1, %3 : i32
    %c0_i32 = arith.constant 0 : i32
    %c0_i32_0 = arith.constant 0 : i32
    %c0_i32_1 = arith.constant 0 : i32
    return %4, %c0_i32, %c0_i32_0 : i32, i32, i32
  }
  func.func @transform_6(%arg0: i32) -> (i32, i32, i32) {
    %c1_i32 = arith.constant 1 : i32
    %0 = arith.cmpi sge, %arg0, %c1_i32 : i32
    %1 = arith.extui %0 : i1 to i32
    %c2_i32 = arith.constant 2 : i32
    %2 = arith.cmpi sge, %arg0, %c2_i32 : i32
    %3 = arith.extui %2 : i1 to i32
    %4 = arith.addi %1, %3 : i32
    %c0_i32 = arith.constant 0 : i32
    %c0_i32_0 = arith.constant 0 : i32
    %c0_i32_1 = arith.constant 0 : i32
    return %4, %c0_i32, %c0_i32_0 : i32, i32, i32
  }
  func.func @transform_7(%arg0: i32) -> (i32, i32, i32) {
    %c1_i32 = arith.constant 1 : i32
    %0 = arith.cmpi sge, %arg0, %c1_i32 : i32
    %1 = arith.extui %0 : i1 to i32
    %c2_i32 = arith.constant 2 : i32
    %2 = arith.cmpi sge, %arg0, %c2_i32 : i32
    %3 = arith.extui %2 : i1 to i32
    %4 = arith.addi %1, %3 : i32
    %c0_i32 = arith.constant 0 : i32
    %c0_i32_0 = arith.constant 0 : i32
    %c0_i32_1 = arith.constant 0 : i32
    return %4, %c0_i32, %c0_i32_0 : i32, i32, i32
  }
  func.func @transform_8(%arg0: i32) -> (i32, i32, i32) {
    %c1_i32 = arith.constant 1 : i32
    %0 = arith.cmpi sge, %arg0, %c1_i32 : i32
    %1 = arith.extui %0 : i1 to i32
    %c2_i32 = arith.constant 2 : i32
    %2 = arith.cmpi sge, %arg0, %c2_i32 : i32
    %3 = arith.extui %2 : i1 to i32
    %4 = arith.addi %1, %3 : i32
    %c0_i32 = arith.constant 0 : i32
    %c0_i32_0 = arith.constant 0 : i32
    %c0_i32_1 = arith.constant 0 : i32
    return %4, %c0_i32, %c0_i32_0 : i32, i32, i32
  }
  func.func @transform_9(%arg0: i32) -> (i32, i32) {
    %c0_i32 = arith.constant 0 : i32
    %c0_i32_0 = arith.constant 0 : i32
    return %arg0, %c0_i32 : i32, i32
  }
}

</mosaic_0001>

<llo_original>
// kernel: _fused_forward.1
$region0: #{_fused_forward.1}
  #allocation0 [shape = 'u32[]', space=smem, size = 0x4, offset = 0x4, fixed_abs, tag = 'smem constant byte address 0x4 - core index']
  #allocation1 [shape = 'u32[144,128]{1,0:T(1,128)}', space=vmem, size = 0x12000, scoped, tag = 'internal scratch']
  %s0 = inlined_call_operand.vmem [shape: bf16[48,16], index: 0, kind: input, shape index: {}]
  %s1 = inlined_call_operand.vmem [shape: bf16[3,16,128], index: 1, kind: input, shape index: {}]
  %s2 = inlined_call_operand.vmem [shape: f32[3,1,128], index: 2, kind: input, shape index: {}]
  %s3 = inlined_call_operand.hbm [shape: bf16[3,128,128], index: 3, kind: input, shape index: {}]
  %s4 = inlined_call_operand.vmem [shape: f32[3,1,128], index: 4, kind: input, shape index: {}]
  %s5 = inlined_call_operand.hbm [shape: bf16[3,128,128], index: 5, kind: input, shape index: {}]
  %s6 = inlined_call_operand.vmem [shape: f32[3,1,128], index: 6, kind: input, shape index: {}]
  %s7 = inlined_call_operand.hbm [shape: bf16[3,128,128], index: 7, kind: input, shape index: {}]
  %s8 = inlined_call_operand.vmem [shape: f32[3,1,128], index: 8, kind: input, shape index: {}]
  %s9 = inlined_call_operand.vmem [shape: bf16[48,128], index: 9, kind: output, shape index: {}]
  %s10 = sld [smem:[#allocation0]]
  $region81: #{_fused_forward.1} parent=0
    _
  %s12 = ssub.s32 1, %s10
  %s13 = scalar_select 0, %s12, %s10
  $region1: #{_fused_forward.1} parent=0
    #allocation2 [shape = 'u8[65536]{0}', space=vmem, size = 0x10000, scoped, tag = 'input window, operand 3']
    #allocation3 [shape = 's32[2]{0}', space=sflag, size = 0x8, scoped, tag = 'scoped memory for _fused_forward.1']
    #allocation4 [shape = 'u8[65536]{0}', space=vmem, size = 0x10000, scoped, tag = 'input window, operand 5']
    #allocation5 [shape = 's32[2]{0}', space=sflag, size = 0x8, scoped, tag = 'scoped memory for _fused_forward.1']
    #allocation6 [shape = 'u8[65536]{0}', space=vmem, size = 0x10000, scoped, tag = 'input window, operand 7']
    %14 = vsyncpa [#allocation3], 0
    %s15 = scalar_lea.sflag [#allocation3], 1
    %16 = vsyncpa %s15, 0
    %17 = vsyncpa [#allocation5], 0
    %s18 = scalar_lea.sflag [#allocation5], 1
    %19 = vsyncpa %s18, 0
    loop: start=0, step=1, limit=5
    $region2: #{_fused_forward.1} parent=1 // loop_pre_header
      _
    $region3: #{_fused_forward.1} parent=1 // loop_header
      %s21 = sphi 0, %s25
      %p22 = scmp.ge.s32.totalorder %s21, 5
      %s31 = sphi 0, %s33
      %s34 = sphi 0, %s31
      %s35 = sphi 0, %s34
      %s51 = sphi 0, %s35
      %s67 = sphi 0, %s69
      %s70 = sphi 0, %s67
      %s71 = sphi 0, %s70
      %s87 = sphi 0, %s71
      %s103 = sphi 0, %s105
      %s106 = sphi 0, %s103
      %s107 = sphi 0, %s106
      %s123 = sphi 0, %s107
      %s139 = sphi 0, %s141
      %s142 = sphi 0, %s139
      %s143 = sphi 0, %s142
      %s159 = sphi 0, %s143
      %s175 = sphi 0, %s177
      %s178 = sphi 0, %s175
      %s179 = sphi 0, %s178
      %s195 = sphi 0, %s179
      %s211 = sphi 0, %s213
      %s214 = sphi 0, %s211
      %s215 = sphi 0, %s214
      %s231 = sphi 0, %s215
      %s247 = sphi 0, %s249
      %s250 = sphi 0, %s247
      %s251 = sphi 0, %s250
      %s267 = sphi 0, %s251
      %s283 = sphi 0, %s285
      %s286 = sphi 0, %s283
      %s287 = sphi 0, %s286
      %s303 = sphi 0, %s287
      %s319 = sphi 0, %s321
      %s322 = sphi 0, %s319
      %s323 = sphi 0, %s322
      %s339 = sphi 0, %s323
      %s345 = sphi 0, %s347
      %s348 = sphi 0, %s345
      %s349 = sphi 0, %s348
      %s365 = sphi 0, %s349
    $region4: #{_fused_forward.1} parent=1 // loop_header_branch
      %24 = sbr.rel (%p22) target = $region8
    $region5: #{_fused_forward.1} parent=1 // loop_body
      %s26 = ssub.s32 %s21, 1
      %s27 = ssub.s32 %s21, 2
      %s28 = sadd.s32 %s21, 1
      %s29 = ssub.s32 %s21, %s28
      %p30 = scmp.eq.s32.totalorder %s29, 0
      %s32 = sadd.s32 %s31, 1
      %s33 = scalar_select %p30, %s31, %s32
      %p36 = pneg %p30
      %p37 = scmp.eq.s32.totalorder %s21, 2
      %p38 = por %p36, %p37
      %p39 = scmp.ne.s32.totalorder %s31, %s34
      %p40 = scmp.eq.s32.totalorder %s21, 0
      %p41 = por %p39, %p40
      %p42 = scmp.ne.s32.totalorder %s31, %s34
      %p43 = scmp.eq.s32.totalorder %s26, 2
      %p44 = por %p42, %p43
      %p45 = scmp.ne.s32.totalorder %s34, %s35
      %p46 = scmp.eq.s32.totalorder %s26, 0
      %p47 = por %p45, %p46
      %p48 = scmp.ne.s32.totalorder %s34, %s35
      %p49 = scmp.eq.s32.totalorder %s27, 2
      %p50 = por %p48, %p49
      %p52 = scmp.ne.s32.totalorder %s35, %s51
      %p53 = scmp.eq.s32.totalorder %s27, 0
      %p54 = por %p52, %p53
      %p55 = scmp.ge.s32.totalorder %s21, 1
      %s56 = scalar_select %p55, 1, 0
      %p57 = scmp.ge.s32.totalorder %s21, 2
      %s58 = scalar_select %p57, 1, 0
      %s59 = sadd.s32 %s56, %s58
      %p60 = scmp.ge.s32.totalorder %s28, 1
      %s61 = scalar_select %p60, 1, 0
      %p62 = scmp.ge.s32.totalorder %s28, 2
      %s63 = scalar_select %p62, 1, 0
      %s64 = sadd.s32 %s61, %s63
      %s65 = ssub.s32 %s59, %s64
      %p66 = scmp.eq.s32.totalorder %s65, 0
      %s68 = sadd.s32 %s67, 1
      %s69 = scalar_select %p66, %s67, %s68
      %p72 = pneg %p66
      %p73 = scmp.eq.s32.totalorder %s21, 2
      %p74 = por %p72, %p73
      %p75 = scmp.ne.s32.totalorder %s67, %s70
      %p76 = scmp.eq.s32.totalorder %s21, 0
      %p77 = por %p75, %p76
      %p78 = scmp.ne.s32.totalorder %s67, %s70
      %p79 = scmp.eq.s32.totalorder %s26, 2
      %p80 = por %p78, %p79
      %p81 = scmp.ne.s32.totalorder %s70, %s71
      %p82 = scmp.eq.s32.totalorder %s26, 0
      %p83 = por %p81, %p82
      %p84 = scmp.ne.s32.totalorder %s70, %s71
      %p85 = scmp.eq.s32.totalorder %s27, 2
      %p86 = por %p84, %p85
      %p88 = scmp.ne.s32.totalorder %s71, %s87
      %p89 = scmp.eq.s32.totalorder %s27, 0
      %p90 = por %p88, %p89
      %p91 = scmp.ge.s32.totalorder %s21, 1
      %s92 = scalar_select %p91, 1, 0
      %p93 = scmp.ge.s32.totalorder %s21, 2
      %s94 = scalar_select %p93, 1, 0
      %s95 = sadd.s32 %s92, %s94
      %p96 = scmp.ge.s32.totalorder %s28, 1
      %s97 = scalar_select %p96, 1, 0
      %p98 = scmp.ge.s32.totalorder %s28, 2
      %s99 = scalar_select %p98, 1, 0
      %s100 = sadd.s32 %s97, %s99
      %s101 = ssub.s32 %s95, %s100
      %p102 = scmp.eq.s32.totalorder %s101, 0
      %s104 = sadd.s32 %s103, 1
      %s105 = scalar_select %p102, %s103, %s104
      %p108 = pneg %p102
      %p109 = scmp.eq.s32.totalorder %s21, 2
      %p110 = por %p108, %p109
      %p111 = scmp.ne.s32.totalorder %s103, %s106
      %p112 = scmp.eq.s32.totalorder %s21, 0
      %p113 = por %p111, %p112
      %p114 = scmp.ne.s32.totalorder %s103, %s106
      %p115 = scmp.eq.s32.totalorder %s26, 2
      %p116 = por %p114, %p115
      %p117 = scmp.ne.s32.totalorder %s106, %s107
      %p118 = scmp.eq.s32.totalorder %s26, 0
      %p119 = por %p117, %p118
      %p120 = scmp.ne.s32.totalorder %s106, %s107
      %p121 = scmp.eq.s32.totalorder %s27, 2
      %p122 = por %p120, %p121
      %p124 = scmp.ne.s32.totalorder %s107, %s123
      %p125 = scmp.eq.s32.totalorder %s27, 0
      %p126 = por %p124, %p125
      %p127 = scmp.ge.s32.totalorder %s21, 1
      %s128 = scalar_select %p127, 1, 0
      %p129 = scmp.ge.s32.totalorder %s21, 2
      %s130 = scalar_select %p129, 1, 0
      %s131 = sadd.s32 %s128, %s130
      %p132 = scmp.ge.s32.totalorder %s28, 1
      %s133 = scalar_select %p132, 1, 0
      %p134 = scmp.ge.s32.totalorder %s28, 2
      %s135 = scalar_select %p134, 1, 0
      %s136 = sadd.s32 %s133, %s135
      %s137 = ssub.s32 %s131, %s136
      %p138 = scmp.eq.s32.totalorder %s137, 0
      %s140 = sadd.s32 %s139, 1
      %s141 = scalar_select %p138, %s139, %s140
      %p144 = pneg %p138
      %p145 = scmp.eq.s32.totalorder %s21, 2
      %p146 = por %p144, %p145
      %p147 = scmp.ne.s32.totalorder %s139, %s142
      %p148 = scmp.eq.s32.totalorder %s21, 0
      %p149 = por %p147, %p148
      %p150 = scmp.ne.s32.totalorder %s139, %s142
      %p151 = scmp.eq.s32.totalorder %s26, 2
      %p152 = por %p150, %p151
      %p153 = scmp.ne.s32.totalorder %s142, %s143
      %p154 = scmp.eq.s32.totalorder %s26, 0
      %p155 = por %p153, %p154
      %p156 = scmp.ne.s32.totalorder %s142, %s143
      %p157 = scmp.eq.s32.totalorder %s27, 2
      %p158 = por %p156, %p157
      %p160 = scmp.ne.s32.totalorder %s143, %s159
      %p161 = scmp.eq.s32.totalorder %s27, 0
      %p162 = por %p160, %p161
      %p163 = scmp.ge.s32.totalorder %s21, 1
      %s164 = scalar_select %p163, 1, 0
      %p165 = scmp.ge.s32.totalorder %s21, 2
      %s166 = scalar_select %p165, 1, 0
      %s167 = sadd.s32 %s164, %s166
      %p168 = scmp.ge.s32.totalorder %s28, 1
      %s169 = scalar_select %p168, 1, 0
      %p170 = scmp.ge.s32.totalorder %s28, 2
      %s171 = scalar_select %p170, 1, 0
      %s172 = sadd.s32 %s169, %s171
      %s173 = ssub.s32 %s167, %s172
      %p174 = scmp.eq.s32.totalorder %s173, 0
      %s176 = sadd.s32 %s175, 1
      %s177 = scalar_select %p174, %s175, %s176
      %p180 = pneg %p174
      %p181 = scmp.eq.s32.totalorder %s21, 2
      %p182 = por %p180, %p181
      %p183 = scmp.ne.s32.totalorder %s175, %s178
      %p184 = scmp.eq.s32.totalorder %s21, 0
      %p185 = por %p183, %p184
      %p186 = scmp.ne.s32.totalorder %s175, %s178
      %p187 = scmp.eq.s32.totalorder %s26, 2
      %p188 = por %p186, %p187
      %p189 = scmp.ne.s32.totalorder %s178, %s179
      %p190 = scmp.eq.s32.totalorder %s26, 0
      %p191 = por %p189, %p190
      %p192 = scmp.ne.s32.totalorder %s178, %s179
      %p193 = scmp.eq.s32.totalorder %s27, 2
      %p194 = por %p192, %p193
      %p196 = scmp.ne.s32.totalorder %s179, %s195
      %p197 = scmp.eq.s32.totalorder %s27, 0
      %p198 = por %p196, %p197
      %p199 = scmp.ge.s32.totalorder %s21, 1
      %s200 = scalar_select %p199, 1, 0
      %p201 = scmp.ge.s32.totalorder %s21, 2
      %s202 = scalar_select %p201, 1, 0
      %s203 = sadd.s32 %s200, %s202
      %p204 = scmp.ge.s32.totalorder %s28, 1
      %s205 = scalar_select %p204, 1, 0
      %p206 = scmp.ge.s32.totalorder %s28, 2
      %s207 = scalar_select %p206, 1, 0
      %s208 = sadd.s32 %s205, %s207
      %s209 = ssub.s32 %s203, %s208
      %p210 = scmp.eq.s32.totalorder %s209, 0
      %s212 = sadd.s32 %s211, 1
      %s213 = scalar_select %p210, %s211, %s212
      %p216 = pneg %p210
      %p217 = scmp.eq.s32.totalorder %s21, 2
      %p218 = por %p216, %p217
      %p219 = scmp.ne.s32.totalorder %s211, %s214
      %p220 = scmp.eq.s32.totalorder %s21, 0
      %p221 = por %p219, %p220
      %p222 = scmp.ne.s32.totalorder %s211, %s214
      %p223 = scmp.eq.s32.totalorder %s26, 2
      %p224 = por %p222, %p223
      %p225 = scmp.ne.s32.totalorder %s214, %s215
      %p226 = scmp.eq.s32.totalorder %s26, 0
      %p227 = por %p225, %p226
      %p228 = scmp.ne.s32.totalorder %s214, %s215
      %p229 = scmp.eq.s32.totalorder %s27, 2
      %p230 = por %p228, %p229
      %p232 = scmp.ne.s32.totalorder %s215, %s231
      %p233 = scmp.eq.s32.totalorder %s27, 0
      %p234 = por %p232, %p233
      %p235 = scmp.ge.s32.totalorder %s21, 1
      %s236 = scalar_select %p235, 1, 0
      %p237 = scmp.ge.s32.totalorder %s21, 2
      %s238 = scalar_select %p237, 1, 0
      %s239 = sadd.s32 %s236, %s238
      %p240 = scmp.ge.s32.totalorder %s28, 1
      %s241 = scalar_select %p240, 1, 0
      %p242 = scmp.ge.s32.totalorder %s28, 2
      %s243 = scalar_select %p242, 1, 0
      %s244 = sadd.s32 %s241, %s243
      %s245 = ssub.s32 %s239, %s244
      %p246 = scmp.eq.s32.totalorder %s245, 0
      %s248 = sadd.s32 %s247, 1
      %s249 = scalar_select %p246, %s247, %s248
      %p252 = pneg %p246
      %p253 = scmp.eq.s32.totalorder %s21, 2
      %p254 = por %p252, %p253
      %p255 = scmp.ne.s32.totalorder %s247, %s250
      %p256 = scmp.eq.s32.totalorder %s21, 0
      %p257 = por %p255, %p256
      %p258 = scmp.ne.s32.totalorder %s247, %s250
      %p259 = scmp.eq.s32.totalorder %s26, 2
      %p260 = por %p258, %p259
      %p261 = scmp.ne.s32.totalorder %s250, %s251
      %p262 = scmp.eq.s32.totalorder %s26, 0
      %p263 = por %p261, %p262
      %p264 = scmp.ne.s32.totalorder %s250, %s251
      %p265 = scmp.eq.s32.totalorder %s27, 2
      %p266 = por %p264, %p265
      %p268 = scmp.ne.s32.totalorder %s251, %s267
      %p269 = scmp.eq.s32.totalorder %s27, 0
      %p270 = por %p268, %p269
      %p271 = scmp.ge.s32.totalorder %s21, 1
      %s272 = scalar_select %p271, 1, 0
      %p273 = scmp.ge.s32.totalorder %s21, 2
      %s274 = scalar_select %p273, 1, 0
      %s275 = sadd.s32 %s272, %s274
      %p276 = scmp.ge.s32.totalorder %s28, 1
      %s277 = scalar_select %p276, 1, 0
      %p278 = scmp.ge.s32.totalorder %s28, 2
      %s279 = scalar_select %p278, 1, 0
      %s280 = sadd.s32 %s277, %s279
      %s281 = ssub.s32 %s275, %s280
      %p282 = scmp.eq.s32.totalorder %s281, 0
      %s284 = sadd.s32 %s283, 1
      %s285 = scalar_select %p282, %s283, %s284
      %p288 = pneg %p282
      %p289 = scmp.eq.s32.totalorder %s21, 2
      %p290 = por %p288, %p289
      %p291 = scmp.ne.s32.totalorder %s283, %s286
      %p292 = scmp.eq.s32.totalorder %s21, 0
      %p293 = por %p291, %p292
      %p294 = scmp.ne.s32.totalorder %s283, %s286
      %p295 = scmp.eq.s32.totalorder %s26, 2
      %p296 = por %p294, %p295
      %p297 = scmp.ne.s32.totalorder %s286, %s287
      %p298 = scmp.eq.s32.totalorder %s26, 0
      %p299 = por %p297, %p298
      %p300 = scmp.ne.s32.totalorder %s286, %s287
      %p301 = scmp.eq.s32.totalorder %s27, 2
      %p302 = por %p300, %p301
      %p304 = scmp.ne.s32.totalorder %s287, %s303
      %p305 = scmp.eq.s32.totalorder %s27, 0
      %p306 = por %p304, %p305
      %p307 = scmp.ge.s32.totalorder %s21, 1
      %s308 = scalar_select %p307, 1, 0
      %p309 = scmp.ge.s32.totalorder %s21, 2
      %s310 = scalar_select %p309, 1, 0
      %s311 = sadd.s32 %s308, %s310
      %p312 = scmp.ge.s32.totalorder %s28, 1
      %s313 = scalar_select %p312, 1, 0
      %p314 = scmp.ge.s32.totalorder %s28, 2
      %s315 = scalar_select %p314, 1, 0
      %s316 = sadd.s32 %s313, %s315
      %s317 = ssub.s32 %s311, %s316
      %p318 = scmp.eq.s32.totalorder %s317, 0
      %s320 = sadd.s32 %s319, 1
      %s321 = scalar_select %p318, %s319, %s320
      %p324 = pneg %p318
      %p325 = scmp.eq.s32.totalorder %s21, 2
      %p326 = por %p324, %p325
      %p327 = scmp.ne.s32.totalorder %s319, %s322
      %p328 = scmp.eq.s32.totalorder %s21, 0
      %p329 = por %p327, %p328
      %p330 = scmp.ne.s32.totalorder %s319, %s322
      %p331 = scmp.eq.s32.totalorder %s26, 2
      %p332 = por %p330, %p331
      %p333 = scmp.ne.s32.totalorder %s322, %s323
      %p334 = scmp.eq.s32.totalorder %s26, 0
      %p335 = por %p333, %p334
      %p336 = scmp.ne.s32.totalorder %s322, %s323
      %p337 = scmp.eq.s32.totalorder %s27, 2
      %p338 = por %p336, %p337
      %p340 = scmp.ne.s32.totalorder %s323, %s339
      %p341 = scmp.eq.s32.totalorder %s27, 0
      %p342 = por %p340, %p341
      %s343 = ssub.s32 %s21, %s28
      %p344 = scmp.eq.s32.totalorder %s343, 0
      %s346 = sadd.s32 %s345, 1
      %s347 = scalar_select %p344, %s345, %s346
      %p350 = pneg %p344
      %p351 = scmp.eq.s32.totalorder %s21, 2
      %p352 = por %p350, %p351
      %p353 = scmp.ne.s32.totalorder %s345, %s348
      %p354 = scmp.eq.s32.totalorder %s21, 0
      %p355 = por %p353, %p354
      %p356 = scmp.ne.s32.totalorder %s345, %s348
      %p357 = scmp.eq.s32.totalorder %s26, 2
      %p358 = por %p356, %p357
      %p359 = scmp.ne.s32.totalorder %s348, %s349
      %p360 = scmp.eq.s32.totalorder %s26, 0
      %p361 = por %p359, %p360
      %p362 = scmp.ne.s32.totalorder %s348, %s349
      %p363 = scmp.eq.s32.totalorder %s27, 2
      %p364 = por %p362, %p363
      %p366 = scmp.ne.s32.totalorder %s349, %s365
      %p367 = scmp.eq.s32.totalorder %s27, 0
      %p368 = por %p366, %p367
      %p369 = scmp.le.s32.totalorder 1, %s21
      %p370 = scmp.lt.s32.totalorder %s21, 4
      %p371 = pnand %p369, %p370
      %p372 = pneg %p371
      // Predicated region
      $region9: #{_fused_forward.1} parent=5 // pred_check
        _
      $region10: #{_fused_forward.1} parent=5 // pred_check_branch
        %374 = sbr.rel (%p371) target = $region12
      $region11: #{_fused_forward.1} parent=5 // pred_region
        %s375 = ssub.s32 %s21, 1
      $region12: #{_fused_forward.1} parent=5 // pred_fallthru
        _
      %p376 = scmp.lt.s32.totalorder %s21, 3
      // Predicated region
      $region13: #{_fused_forward.1} parent=5 // pred_check
        %p377 = pneg %p376
      $region14: #{_fused_forward.1} parent=5 // pred_check_branch
        %379 = sbr.rel (%p377) target = $region16
      $region15: #{_fused_forward.1} parent=5 // pred_region
        // Predicated region
        $region17: #{_fused_forward.1} parent=15 // pred_check
          %p380 = pneg %p41
        $region18: #{_fused_forward.1} parent=15 // pred_check_branch
          %382 = sbr.rel (%p380) target = $region20
        $region19: #{_fused_forward.1} parent=15 // pred_region
          %s383 = smul.u32 2, %s21
          %p384 = scmp.lt.s32.totalorder %s383, 5
          %s385 = scalar_select %p384, %s383, 5
          %s386 = smul.addr %s385, 4
          %s387 = scalar_lea.vmem %s0, %s386
          %s388 = smul.u32 2, %s21
        $region20: #{_fused_forward.1} parent=15 // pred_fallthru
          _
        // Predicated region
        $region21: #{_fused_forward.1} parent=15 // pred_check
          %p389 = pneg %p77
        $region22: #{_fused_forward.1} parent=15 // pred_check_branch
          %391 = sbr.rel (%p389) target = $region24
        $region23: #{_fused_forward.1} parent=15 // pred_region
          %p392 = scmp.ge.s32.totalorder %s21, 1
          %s393 = scalar_select %p392, 1, 0
          %p394 = scmp.ge.s32.totalorder %s21, 2
          %s395 = scalar_select %p394, 1, 0
          %s396 = sadd.s32 %s393, %s395
          %p397 = scmp.lt.s32.totalorder %s396, 2
          %s398 = scalar_select %p397, %s396, 2
          %s399 = smul.addr %s398, 2
          %s400 = smul.addr %s399, 4
          %s401 = scalar_lea.vmem %s1, %s400
          %p402 = scmp.ge.s32.totalorder %s21, 1
          %s403 = scalar_select %p402, 1, 0
          %p404 = scmp.ge.s32.totalorder %s21, 2
          %s405 = scalar_select %p404, 1, 0
          %s406 = sadd.s32 %s403, %s405
        $region24: #{_fused_forward.1} parent=15 // pred_fallthru
          _
        // Predicated region
        $region25: #{_fused_forward.1} parent=15 // pred_check
          %p407 = pneg %p113
        $region26: #{_fused_forward.1} parent=15 // pred_check_branch
          %409 = sbr.rel (%p407) target = $region28
        $region27: #{_fused_forward.1} parent=15 // pred_region
          %p410 = scmp.ge.s32.totalorder %s21, 1
          %s411 = scalar_select %p410, 1, 0
          %p412 = scmp.ge.s32.totalorder %s21, 2
          %s413 = scalar_select %p412, 1, 0
          %s414 = sadd.s32 %s411, %s413
          %p415 = scmp.lt.s32.totalorder %s414, 2
          %s416 = scalar_select %p415, %s414, 2
          %s417 = scalar_lea.vmem %s2, %s416
          %p418 = scmp.ge.s32.totalorder %s21, 1
          %s419 = scalar_select %p418, 1, 0
          %p420 = scmp.ge.s32.totalorder %s21, 2
          %s421 = scalar_select %p420, 1, 0
          %s422 = sadd.s32 %s419, %s421
        $region28: #{_fused_forward.1} parent=15 // pred_fallthru
          _
        // Predicated region
        $region29: #{_fused_forward.1} parent=15 // pred_check
          %p423 = pneg %p149
        $region30: #{_fused_forward.1} parent=15 // pred_check_branch
          %425 = sbr.rel (%p423) target = $region32
        $region31: #{_fused_forward.1} parent=15 // pred_region
          %s426 = sand.u32 %s139, 1
          %s427 = scalar_lea.sflag [#allocation3], %s426
          %s428 = sand.u32 %s139, 1
          %s429 = smul.addr %s428, 64
          %s430 = scalar_lea.vmem [#allocation2], %s429
          %p431 = scmp.ge.s32.totalorder %s21, 1
          %s432 = scalar_select %p431, 1, 0
          %p433 = scmp.ge.s32.totalorder %s21, 2
          %s434 = scalar_select %p433, 1, 0
          %s435 = sadd.s32 %s432, %s434
          %s437 = ssub.s32 1024, 1024
          %438 = vsyncadd %s427, %s437
          %s439 = smul.addr %s435, 16
          %s440 = smul.addr %s439, 64
          %s441 = scalar_lea.hbm %s3, %s440
          %s442 = sshll.u32 %s430, 4
          %s443 = int_to_ptr.vmem [resolvable:$true] %s442
          %448 = dma.hbm_to_vmem [thread:$0]  %s441, 1024, %s443, %s427, 64, 64, 4
        $region32: #{_fused_forward.1} parent=15 // pred_fallthru
          _
        // Predicated region
        $region33: #{_fused_forward.1} parent=15 // pred_check
          %p449 = pneg %p185
        $region34: #{_fused_forward.1} parent=15 // pred_check_branch
          %451 = sbr.rel (%p449) target = $region36
        $region35: #{_fused_forward.1} parent=15 // pred_region
          %p452 = scmp.ge.s32.totalorder %s21, 1
          %s453 = scalar_select %p452, 1, 0
          %p454 = scmp.ge.s32.totalorder %s21, 2
          %s455 = scalar_select %p454, 1, 0
          %s456 = sadd.s32 %s453, %s455
          %p457 = scmp.lt.s32.totalorder %s456, 2
          %s458 = scalar_select %p457, %s456, 2
          %s459 = scalar_lea.vmem %s4, %s458
          %p460 = scmp.ge.s32.totalorder %s21, 1
          %s461 = scalar_select %p460, 1, 0
          %p462 = scmp.ge.s32.totalorder %s21, 2
          %s463 = scalar_select %p462, 1, 0
          %s464 = sadd.s32 %s461, %s463
        $region36: #{_fused_forward.1} parent=15 // pred_fallthru
          _
        // Predicated region
        $region37: #{_fused_forward.1} parent=15 // pred_check
          %p465 = pneg %p221
        $region38: #{_fused_forward.1} parent=15 // pred_check_branch
          %467 = sbr.rel (%p465) target = $region40
        $region39: #{_fused_forward.1} parent=15 // pred_region
          %s468 = sand.u32 %s21, 1
          %s469 = scalar_lea.sflag [#allocation5], %s468
          %s470 = sand.u32 %s211, 1
          %s471 = smul.addr %s470, 64
          %s472 = scalar_lea.vmem [#allocation4], %s471
          %p473 = scmp.ge.s32.totalorder %s21, 1
          %s474 = scalar_select %p473, 1, 0
          %p475 = scmp.ge.s32.totalorder %s21, 2
          %s476 = scalar_select %p475, 1, 0
          %s477 = sadd.s32 %s474, %s476
          %s479 = ssub.s32 1024, 1024
          %480 = vsyncadd %s469, %s479
          %s481 = smul.addr %s477, 16
          %s482 = smul.addr %s481, 64
          %s483 = scalar_lea.hbm %s5, %s482
          %s484 = sshll.u32 %s472, 4
          %s485 = int_to_ptr.vmem [resolvable:$true] %s484
          %490 = dma.hbm_to_vmem [thread:$0]  %s483, 1024, %s485, %s469, 64, 64, 4
        $region40: #{_fused_forward.1} parent=15 // pred_fallthru
          _
        // Predicated region
        $region41: #{_fused_forward.1} parent=15 // pred_check
          %p491 = pneg %p257
        $region42: #{_fused_forward.1} parent=15 // pred_check_branch
          %493 = sbr.rel (%p491) target = $region44
        $region43: #{_fused_forward.1} parent=15 // pred_region
          %p494 = scmp.ge.s32.totalorder %s21, 1
          %s495 = scalar_select %p494, 1, 0
          %p496 = scmp.ge.s32.totalorder %s21, 2
          %s497 = scalar_select %p496, 1, 0
          %s498 = sadd.s32 %s495, %s497
          %p499 = scmp.lt.s32.totalorder %s498, 2
          %s500 = scalar_select %p499, %s498, 2
          %s501 = scalar_lea.vmem %s6, %s500
          %p502 = scmp.ge.s32.totalorder %s21, 1
          %s503 = scalar_select %p502, 1, 0
          %p504 = scmp.ge.s32.totalorder %s21, 2
          %s505 = scalar_select %p504, 1, 0
          %s506 = sadd.s32 %s503, %s505
        $region44: #{_fused_forward.1} parent=15 // pred_fallthru
          _
        // Predicated region
        $region45: #{_fused_forward.1} parent=15 // pred_check
          %p507 = pneg %p293
        $region46: #{_fused_forward.1} parent=15 // pred_check_branch
          %509 = sbr.rel (%p507) target = $region48
        $region47: #{_fused_forward.1} parent=15 // pred_region
          %s510 = sand.u32 %s21, 1
          %s511 = scalar_lea.sflag [#allocation5], %s510
          %s512 = sand.u32 %s283, 1
          %s513 = smul.addr %s512, 64
          %s514 = scalar_lea.vmem [#allocation6], %s513
          %p515 = scmp.ge.s32.totalorder %s21, 1
          %s516 = scalar_select %p515, 1, 0
          %p517 = scmp.ge.s32.totalorder %s21, 2
          %s518 = scalar_select %p517, 1, 0
          %s519 = sadd.s32 %s516, %s518
          %s521 = ssub.s32 1024, 1024
          %522 = vsyncadd %s511, %s521
          %s523 = smul.addr %s519, 16
          %s524 = smul.addr %s523, 64
          %s525 = scalar_lea.hbm %s7, %s524
          %s526 = sshll.u32 %s514, 4
          %s527 = int_to_ptr.vmem [resolvable:$true] %s526
          %532 = dma.hbm_to_vmem [thread:$0]  %s525, 1024, %s527, %s511, 64, 64, 4
        $region48: #{_fused_forward.1} parent=15 // pred_fallthru
          _
        // Predicated region
        $region49: #{_fused_forward.1} parent=15 // pred_check
          %p533 = pneg %p329
        $region50: #{_fused_forward.1} parent=15 // pred_check_branch
          %535 = sbr.rel (%p533) target = $region52
        $region51: #{_fused_forward.1} parent=15 // pred_region
          %p536 = scmp.ge.s32.totalorder %s21, 1
          %s537 = scalar_select %p536, 1, 0
          %p538 = scmp.ge.s32.totalorder %s21, 2
          %s539 = scalar_select %p538, 1, 0
          %s540 = sadd.s32 %s537, %s539
          %p541 = scmp.lt.s32.totalorder %s540, 2
          %s542 = scalar_select %p541, %s540, 2
          %s543 = scalar_lea.vmem %s8, %s542
          %p544 = scmp.ge.s32.totalorder %s21, 1
          %s545 = scalar_select %p544, 1, 0
          %p546 = scmp.ge.s32.totalorder %s21, 2
          %s547 = scalar_select %p546, 1, 0
          %s548 = sadd.s32 %s545, %s547
        $region52: #{_fused_forward.1} parent=15 // pred_fallthru
          _
      $region16: #{_fused_forward.1} parent=5 // pred_fallthru
        _
      %p549 = scmp.le.s32.totalorder 1, %s21
      %p550 = scmp.lt.s32.totalorder %s21, 4
      %p551 = pnand %p549, %p550
      %p552 = pneg %p551
      // Predicated region
      $region53: #{_fused_forward.1} parent=5 // pred_check
        _
      $region54: #{_fused_forward.1} parent=5 // pred_check_branch
        %554 = sbr.rel (%p551) target = $region56
      $region55: #{_fused_forward.1} parent=5 // pred_region
        %s555 = ssub.s32 %s21, 1
        %s556 = sand.u32 %s142, 1
        %s557 = scalar_lea.sflag [#allocation3], %s556
        %s558 = sand.u32 %s142, 1
        %s559 = smul.addr %s558, 64
        %s560 = scalar_lea.vmem [#allocation2], %s559
        // Predicated region
        $region57: #{_fused_forward.1} parent=55 // pred_check
          %p561 = pneg %p155
        $region58: #{_fused_forward.1} parent=55 // pred_check_branch
          %563 = sbr.rel (%p561) target = $region60
        $region59: #{_fused_forward.1} parent=55 // pred_region
          %564 = dma.done %s557, 1024
        $region60: #{_fused_forward.1} parent=55 // pred_fallthru
          _
        %s565 = sand.u32 %s26, 1
        %s566 = scalar_lea.sflag [#allocation5], %s565
        %s567 = sand.u32 %s214, 1
        %s568 = smul.addr %s567, 64
        %s569 = scalar_lea.vmem [#allocation4], %s568
        // Predicated region
        $region61: #{_fused_forward.1} parent=55 // pred_check
          %p570 = pneg %p227
        $region62: #{_fused_forward.1} parent=55 // pred_check_branch
          %572 = sbr.rel (%p570) target = $region64
        $region63: #{_fused_forward.1} parent=55 // pred_region
          %573 = dma.done %s566, 1024
        $region64: #{_fused_forward.1} parent=55 // pred_fallthru
          _
        %s574 = sand.u32 %s26, 1
        %s575 = scalar_lea.sflag [#allocation5], %s574
        %s576 = sand.u32 %s286, 1
        %s577 = smul.addr %s576, 64
        %s578 = scalar_lea.vmem [#allocation6], %s577
        // Predicated region
        $region65: #{_fused_forward.1} parent=55 // pred_check
          %p579 = pneg %p299
        $region66: #{_fused_forward.1} parent=55 // pred_check_branch
          %581 = sbr.rel (%p579) target = $region68
        $region67: #{_fused_forward.1} parent=55 // pred_region
          %582 = dma.done %s575, 1024
        $region68: #{_fused_forward.1} parent=55 // pred_fallthru
          _
        %s583 = smul.u32 2, %s26
        %p584 = scmp.lt.s32.totalorder %s583, 5
        %s585 = scalar_select %p584, %s583, 5
        %s586 = smul.addr %s585, 4
        %s587 = scalar_lea.vmem %s0, %s586
        %p588 = pneg %p47
        %p589 = pneg %p44
        %p590 = scmp.ge.s32.totalorder %s26, 1
        %s591 = scalar_select %p590, 1, 0
        %p592 = scmp.ge.s32.totalorder %s26, 2
        %s593 = scalar_select %p592, 1, 0
        %s594 = sadd.s32 %s591, %s593
        %p595 = scmp.lt.s32.totalorder %s594, 2
        %s596 = scalar_select %p595, %s594, 2
        %s597 = smul.addr %s596, 2
        %s598 = smul.addr %s597, 4
        %s599 = scalar_lea.vmem %s1, %s598
        %p600 = pneg %p83
        %p601 = pneg %p80
        %p602 = scmp.ge.s32.totalorder %s26, 1
        %s603 = scalar_select %p602, 1, 0
        %p604 = scmp.ge.s32.totalorder %s26, 2
        %s605 = scalar_select %p604, 1, 0
        %s606 = sadd.s32 %s603, %s605
        %p607 = scmp.lt.s32.totalorder %s606, 2
        %s608 = scalar_select %p607, %s606, 2
        %s609 = scalar_lea.vmem %s2, %s608
        %p610 = pneg %p119
        %p611 = pneg %p116
        %s612 = sand.u32 %s142, 1
        %s613 = scalar_lea.sflag [#allocation3], %s612
        %s614 = sand.u32 %s142, 1
        %s615 = smul.addr %s614, 64
        %s616 = scalar_lea.vmem [#allocation2], %s615
        %p617 = pneg %p155
        %p618 = pneg %p152
        %p619 = scmp.ge.s32.totalorder %s26, 1
        %s620 = scalar_select %p619, 1, 0
        %p621 = scmp.ge.s32.totalorder %s26, 2
        %s622 = scalar_select %p621, 1, 0
        %s623 = sadd.s32 %s620, %s622
        %p624 = scmp.lt.s32.totalorder %s623, 2
        %s625 = scalar_select %p624, %s623, 2
        %s626 = scalar_lea.vmem %s4, %s625
        %p627 = pneg %p191
        %p628 = pneg %p188
        %s629 = sand.u32 %s26, 1
        %s630 = scalar_lea.sflag [#allocation5], %s629
        %s631 = sand.u32 %s214, 1
        %s632 = smul.addr %s631, 64
        %s633 = scalar_lea.vmem [#allocation4], %s632
        %p634 = pneg %p227
        %p635 = pneg %p224
        %p636 = scmp.ge.s32.totalorder %s26, 1
        %s637 = scalar_select %p636, 1, 0
        %p638 = scmp.ge.s32.totalorder %s26, 2
        %s639 = scalar_select %p638, 1, 0
        %s640 = sadd.s32 %s637, %s639
        %p641 = scmp.lt.s32.totalorder %s640, 2
        %s642 = scalar_select %p641, %s640, 2
        %s643 = scalar_lea.vmem %s6, %s642
        %p644 = pneg %p263
        %p645 = pneg %p260
        %s646 = sand.u32 %s26, 1
        %s647 = scalar_lea.sflag [#allocation5], %s646
        %s648 = sand.u32 %s286, 1
        %s649 = smul.addr %s648, 64
        %s650 = scalar_lea.vmem [#allocation6], %s649
        %p651 = pneg %p299
        %p652 = pneg %p296
        %p653 = scmp.ge.s32.totalorder %s26, 1
        %s654 = scalar_select %p653, 1, 0
        %p655 = scmp.ge.s32.totalorder %s26, 2
        %s656 = scalar_select %p655, 1, 0
        %s657 = sadd.s32 %s654, %s656
        %p658 = scmp.lt.s32.totalorder %s657, 2
        %s659 = scalar_select %p658, %s657, 2
        %s660 = scalar_lea.vmem %s8, %s659
        %p661 = pneg %p335
        %p662 = pneg %p332
        %p663 = pneg %p361
        %p664 = pneg %p358
        %s665 = smul.u32 2, %s26
        %p666 = scmp.lt.s32.totalorder %s665, 5
        %s667 = scalar_select %p666, %s665, 5
        %s668 = smul.addr %s667, 4
        %s669 = scalar_lea.vmem %s9, %s668
        %s670 = smul.u32 2, %s26
        %p671 = scmp.lt.s32.totalorder %s670, 5
        %s672 = scalar_select %p671, %s670, 5
        %s673 = smul.addr %s672, 4
        %s674 = scalar_lea.vmem %s0, %s673
        %s675 = smul.u32 2, %s26
        %p676 = scmp.ge.s32.totalorder %s26, 1
        %s677 = scalar_select %p676, 1, 0
        %p678 = scmp.ge.s32.totalorder %s26, 2
        %s679 = scalar_select %p678, 1, 0
        %s680 = sadd.s32 %s677, %s679
        %p681 = scmp.lt.s32.totalorder %s680, 2
        %s682 = scalar_select %p681, %s680, 2
        %s683 = smul.addr %s682, 2
        %s684 = smul.addr %s683, 4
        %s685 = scalar_lea.vmem %s1, %s684
        %p686 = scmp.ge.s32.totalorder %s26, 1
        %s687 = scalar_select %p686, 1, 0
        %p688 = scmp.ge.s32.totalorder %s26, 2
        %s689 = scalar_select %p688, 1, 0
        %s690 = sadd.s32 %s687, %s689
        %p691 = scmp.ge.s32.totalorder %s26, 1
        %s692 = scalar_select %p691, 1, 0
        %p693 = scmp.ge.s32.totalorder %s26, 2
        %s694 = scalar_select %p693, 1, 0
        %s695 = sadd.s32 %s692, %s694
        %p696 = scmp.lt.s32.totalorder %s695, 2
        %s697 = scalar_select %p696, %s695, 2
        %s698 = scalar_lea.vmem %s2, %s697
        %p699 = scmp.ge.s32.totalorder %s26, 1
        %s700 = scalar_select %p699, 1, 0
        %p701 = scmp.ge.s32.totalorder %s26, 2
        %s702 = scalar_select %p701, 1, 0
        %s703 = sadd.s32 %s700, %s702
        %p704 = scmp.ge.s32.totalorder %s26, 1
        %s705 = scalar_select %p704, 1, 0
        %p706 = scmp.ge.s32.totalorder %s26, 2
        %s707 = scalar_select %p706, 1, 0
        %s708 = sadd.s32 %s705, %s707
        %p709 = scmp.ge.s32.totalorder %s26, 1
        %s710 = scalar_select %p709, 1, 0
        %p711 = scmp.ge.s32.totalorder %s26, 2
        %s712 = scalar_select %p711, 1, 0
        %s713 = sadd.s32 %s710, %s712
        %p714 = scmp.lt.s32.totalorder %s713, 2
        %s715 = scalar_select %p714, %s713, 2
        %s716 = scalar_lea.vmem %s4, %s715
        %p717 = scmp.ge.s32.totalorder %s26, 1
        %s718 = scalar_select %p717, 1, 0
        %p719 = scmp.ge.s32.totalorder %s26, 2
        %s720 = scalar_select %p719, 1, 0
        %s721 = sadd.s32 %s718, %s720
        %p722 = scmp.ge.s32.totalorder %s26, 1
        %s723 = scalar_select %p722, 1, 0
        %p724 = scmp.ge.s32.totalorder %s26, 2
        %s725 = scalar_select %p724, 1, 0
        %s726 = sadd.s32 %s723, %s725
        %p727 = scmp.ge.s32.totalorder %s26, 1
        %s728 = scalar_select %p727, 1, 0
        %p729 = scmp.ge.s32.totalorder %s26, 2
        %s730 = scalar_select %p729, 1, 0
        %s731 = sadd.s32 %s728, %s730
        %p732 = scmp.lt.s32.totalorder %s731, 2
        %s733 = scalar_select %p732, %s731, 2
        %s734 = scalar_lea.vmem %s6, %s733
        %p735 = scmp.ge.s32.totalorder %s26, 1
        %s736 = scalar_select %p735, 1, 0
        %p737 = scmp.ge.s32.totalorder %s26, 2
        %s738 = scalar_select %p737, 1, 0
        %s739 = sadd.s32 %s736, %s738
        %p740 = scmp.ge.s32.totalorder %s26, 1
        %s741 = scalar_select %p740, 1, 0
        %p742 = scmp.ge.s32.totalorder %s26, 2
        %s743 = scalar_select %p742, 1, 0
        %s744 = sadd.s32 %s741, %s743
        %p745 = scmp.ge.s32.totalorder %s26, 1
        %s746 = scalar_select %p745, 1, 0
        %p747 = scmp.ge.s32.totalorder %s26, 2
        %s748 = scalar_select %p747, 1, 0
        %s749 = sadd.s32 %s746, %s748
        %p750 = scmp.lt.s32.totalorder %s749, 2
        %s751 = scalar_select %p750, %s749, 2
        %s752 = scalar_lea.vmem %s8, %s751
        %p753 = scmp.ge.s32.totalorder %s26, 1
        %s754 = scalar_select %p753, 1, 0
        %p755 = scmp.ge.s32.totalorder %s26, 2
        %s756 = scalar_select %p755, 1, 0
        %s757 = sadd.s32 %s754, %s756
        %s758 = smul.u32 2, %s26
        %p759 = scmp.lt.s32.totalorder %s758, 5
        %s760 = scalar_select %p759, %s758, 5
        %s761 = smul.addr %s760, 4
        %s762 = scalar_lea.vmem %s9, %s761
        %s763 = smul.u32 2, %s26
        %v765 = vld [vmem:[%s674] sm:$0xf]
        %v766 = vld [vmem:[%s674 + $0x4] sm:$0xf]
        %v767 = vld [vmem:[%s685] sm:$0xf]
        %v768 = vld [vmem:[%s685 + $0x4] sm:$0xf]
        %v769 = vld [vmem:[%s698] sm:$0x1]
        %v771 = vlaneseq
        %v772 = vshrl.u32 %v771, 7
        %v773 = vsub.s32 0, %v772
        %v774 = vrot.slane %v769, %v773
        %v778 = vunpack.c.l.b16 %v765
        %v779 = vunpack.c.l.b16 %v766
        %v780 = vpack.c.b16 %v779, %v778
        %v783 = vunpack.c.l.b16 %v767
        %v784 = vunpack.c.l.b16 %v768
        %v785 = vpack.c.b16 %v784, %v783
        %vm787 = vcmask 130048
        %v789 = vsel %vm787, %v780, 0
        %791 = vmatprep.subr.bf16.mxu0 0
        %792 = vmatpush1.bf16.msra.mxu0 %v785
        %793 = vmatprep.subr.bf16.mxu0 0
        %794 = vmatpush1.bf16.msra.mxu0 0
        %795 = vmatprep.subr.bf16.mxu0 0
        %796 = vmatpush1.bf16.msra.mxu0 0
        %797 = vmatprep.subr.bf16.mxu0 0
        %798 = vmatpush1.bf16.msra.mxu0 0
        %799 = vmatprep.subr.bf16.mxu0 0
        %800 = vmatpush1.bf16.msra.mxu0 0
        %801 = vmatprep.subr.bf16.mxu0 0
        %802 = vmatpush1.bf16.msra.mxu0 0
        %803 = vmatprep.subr.bf16.mxu0 0
        %804 = vmatpush1.bf16.msra.mxu0 0
        %805 = vmatprep.subr.bf16.mxu0 0
        %806 = vmatpush1.bf16.msra.mxu0 0
        %807 = vmatprep.subr.bf16.mxu0 0
        %808 = vmatpush1.bf16.msra.mxu0 0
        %809 = vmatprep.subr.bf16.mxu0 0
        %810 = vmatpush1.bf16.msra.mxu0 0
        %811 = vmatprep.subr.bf16.mxu0 0
        %812 = vmatpush1.bf16.msra.mxu0 0
        %813 = vmatprep.subr.bf16.mxu0 0
        %814 = vmatpush1.bf16.msra.mxu0 0
        %815 = vmatprep.subr.bf16.mxu0 0
        %816 = vmatpush1.bf16.msra.mxu0 0
        %817 = vmatprep.subr.bf16.mxu0 0
        %818 = vmatpush1.bf16.msra.mxu0 0
        %819 = vmatprep.subr.bf16.mxu0 0
        %820 = vmatpush1.bf16.msra.mxu0 0
        %821 = vmatprep.subr.bf16.mxu0 0
        %822 = vmatpush1.bf16.msra.mxu0 0
        %823 = vmatprep.mubr.bf16.mxu0 0
        %824 = vmatmul.mubr.bf16.gmra.mrb[0].mxu0 %v789
        %v825 = vpop.f32.mrb[0].mxu0
        %v826 = vadd.f32 %v774, %v825
        %v827 = vpop.f32.mrb[0].mxu0
        %v828 = vpop.f32.mrb[0].mxu0
        %v829 = vadd.f32 %v774, %v828
        %v830 = vpop.f32.mrb[0].mxu0
        %831 = vdwg.mxu0
        %v832 = vmax.f32 %v826, 0.0
        %v833 = vmax.f32 %v829, 0.0
        %v834 = vpack.c.bf16 %v833, %v832
        %v835 = vld [vmem:[%s560] sm:$0xf]
        %v836 = vld [vmem:[%s560 + $0x4] sm:$0xf]
        %v837 = vld [vmem:[%s560 + $0x8] sm:$0xf]
        %v838 = vld [vmem:[%s560 + $0xc] sm:$0xf]
        %v839 = vld [vmem:[%s560 + $0x10] sm:$0xf]
        %v840 = vld [vmem:[%s560 + $0x14] sm:$0xf]
        %v841 = vld [vmem:[%s560 + $0x18] sm:$0xf]
        %v842 = vld [vmem:[%s560 + $0x1c] sm:$0xf]
        %v843 = vld [vmem:[%s560 + $0x20] sm:$0xf]
        %v844 = vld [vmem:[%s560 + $0x24] sm:$0xf]
        %v845 = vld [vmem:[%s560 + $0x28] sm:$0xf]
        %v846 = vld [vmem:[%s560 + $0x2c] sm:$0xf]
        %v847 = vld [vmem:[%s560 + $0x30] sm:$0xf]
        %v848 = vld [vmem:[%s560 + $0x34] sm:$0xf]
        %v849 = vld [vmem:[%s560 + $0x38] sm:$0xf]
        %v850 = vld [vmem:[%s560 + $0x3c] sm:$0xf]
        %v851 = vld [vmem:[%s716] sm:$0x1]
        %v853 = vlaneseq
        %v854 = vshrl.u32 %v853, 7
        %v855 = vsub.s32 0, %v854
        %v856 = vrot.slane %v851, %v855
        %v874 = vunpack.c.l.b16 %v835
        %v875 = vunpack.c.l.b16 %v836
        %v876 = vunpack.c.l.b16 %v837
        %v877 = vunpack.c.l.b16 %v838
        %v878 = vunpack.c.l.b16 %v839
        %v879 = vunpack.c.l.b16 %v840
        %v880 = vunpack.c.l.b16 %v841
        %v881 = vunpack.c.l.b16 %v842
        %v882 = vunpack.c.l.b16 %v843
        %v883 = vunpack.c.l.b16 %v844
        %v884 = vunpack.c.l.b16 %v845
        %v885 = vunpack.c.l.b16 %v846
        %v886 = vunpack.c.l.b16 %v847
        %v887 = vunpack.c.l.b16 %v848
        %v888 = vunpack.c.l.b16 %v849
        %v889 = vunpack.c.l.b16 %v850
        %v890 = vpack.c.b16 %v875, %v874
        %v891 = vpack.c.b16 %v877, %v876
        %v892 = vpack.c.b16 %v879, %v878
        %v893 = vpack.c.b16 %v881, %v880
        %v894 = vpack.c.b16 %v883, %v882
        %v895 = vpack.c.b16 %v885, %v884
        %v896 = vpack.c.b16 %v887, %v886
        %v897 = vpack.c.b16 %v889, %v888
        %906 = vmatprep.subr.bf16.mxu0 0
        %907 = vmatpush1.bf16.msra.mxu0 %v890
        %908 = vmatprep.subr.bf16.mxu0 0
        %909 = vmatpush1.bf16.msra.mxu0 %v891
        %910 = vmatprep.subr.bf16.mxu0 0
        %911 = vmatpush1.bf16.msra.mxu0 %v892
        %912 = vmatprep.subr.bf16.mxu0 0
        %913 = vmatpush1.bf16.msra.mxu0 %v893
        %914 = vmatprep.subr.bf16.mxu0 0
        %915 = vmatpush1.bf16.msra.mxu0 %v894
        %916 = vmatprep.subr.bf16.mxu0 0
        %917 = vmatpush1.bf16.msra.mxu0 %v895
        %918 = vmatprep.subr.bf16.mxu0 0
        %919 = vmatpush1.bf16.msra.mxu0 %v896
        %920 = vmatprep.subr.bf16.mxu0 0
        %921 = vmatpush1.bf16.msra.mxu0 %v897
        %922 = vmatprep.subr.bf16.mxu0 0
        %923 = vmatpush1.bf16.msra.mxu0 0
        %924 = vmatprep.subr.bf16.mxu0 0
        %925 = vmatpush1.bf16.msra.mxu0 0
        %926 = vmatprep.subr.bf16.mxu0 0
        %927 = vmatpush1.bf16.msra.mxu0 0
        %928 = vmatprep.subr.bf16.mxu0 0
        %929 = vmatpush1.bf16.msra.mxu0 0
        %930 = vmatprep.subr.bf16.mxu0 0
        %931 = vmatpush1.bf16.msra.mxu0 0
        %932 = vmatprep.subr.bf16.mxu0 0
        %933 = vmatpush1.bf16.msra.mxu0 0
        %934 = vmatprep.subr.bf16.mxu0 0
        %935 = vmatpush1.bf16.msra.mxu0 0
        %936 = vmatprep.subr.bf16.mxu0 0
        %937 = vmatpush1.bf16.msra.mxu0 0
        %938 = vmatprep.mubr.bf16.mxu0 0
        %939 = vmatmul.mubr.bf16.gmra.mrb[0].mxu0 %v834
        %v940 = vpop.f32.mrb[0].mxu0
        %v941 = vadd.f32 %v856, %v940
        %v942 = vpop.f32.mrb[0].mxu0
        %v943 = vpop.f32.mrb[0].mxu0
        %v944 = vadd.f32 %v856, %v943
        %v945 = vpop.f32.mrb[0].mxu0
        %946 = vdwg.mxu0
        %v947 = vmax.f32 %v941, 0.0
        %v948 = vmax.f32 %v944, 0.0
        %v949 = vpack.c.bf16 %v948, %v947
        %v950 = vld [vmem:[%s569] sm:$0xf]
        %v951 = vld [vmem:[%s569 + $0x4] sm:$0xf]
        %v952 = vld [vmem:[%s569 + $0x8] sm:$0xf]
        %v953 = vld [vmem:[%s569 + $0xc] sm:$0xf]
        %v954 = vld [vmem:[%s569 + $0x10] sm:$0xf]
        %v955 = vld [vmem:[%s569 + $0x14] sm:$0xf]
        %v956 = vld [vmem:[%s569 + $0x18] sm:$0xf]
        %v957 = vld [vmem:[%s569 + $0x1c] sm:$0xf]
        %v958 = vld [vmem:[%s569 + $0x20] sm:$0xf]
        %v959 = vld [vmem:[%s569 + $0x24] sm:$0xf]
        %v960 = vld [vmem:[%s569 + $0x28] sm:$0xf]
        %v961 = vld [vmem:[%s569 + $0x2c] sm:$0xf]
        %v962 = vld [vmem:[%s569 + $0x30] sm:$0xf]
        %v963 = vld [vmem:[%s569 + $0x34] sm:$0xf]
        %v964 = vld [vmem:[%s569 + $0x38] sm:$0xf]
        %v965 = vld [vmem:[%s569 + $0x3c] sm:$0xf]
        %v966 = vld [vmem:[%s734] sm:$0x1]
        %v968 = vlaneseq
        %v969 = vshrl.u32 %v968, 7
        %v970 = vsub.s32 0, %v969
        %v971 = vrot.slane %v966, %v970
        %v989 = vunpack.c.l.b16 %v950
        %v990 = vunpack.c.l.b16 %v951
        %v991 = vunpack.c.l.b16 %v952
        %v992 = vunpack.c.l.b16 %v953
        %v993 = vunpack.c.l.b16 %v954
        %v994 = vunpack.c.l.b16 %v955
        %v995 = vunpack.c.l.b16 %v956
        %v996 = vunpack.c.l.b16 %v957
        %v997 = vunpack.c.l.b16 %v958
        %v998 = vunpack.c.l.b16 %v959
        %v999 = vunpack.c.l.b16 %v960
        %v1000 = vunpack.c.l.b16 %v961
        %v1001 = vunpack.c.l.b16 %v962
        %v1002 = vunpack.c.l.b16 %v963
        %v1003 = vunpack.c.l.b16 %v964
        %v1004 = vunpack.c.l.b16 %v965
        %v1005 = vpack.c.b16 %v990, %v989
        %v1006 = vpack.c.b16 %v992, %v991
        %v1007 = vpack.c.b16 %v994, %v993
        %v1008 = vpack.c.b16 %v996, %v995
        %v1009 = vpack.c.b16 %v998, %v997
        %v1010 = vpack.c.b16 %v1000, %v999
        %v1011 = vpack.c.b16 %v1002, %v1001
        %v1012 = vpack.c.b16 %v1004, %v1003
        %1021 = vmatprep.subr.bf16.mxu0 0
        %1022 = vmatpush1.bf16.msra.mxu0 %v1005
        %1023 = vmatprep.subr.bf16.mxu0 0
        %1024 = vmatpush1.bf16.msra.mxu0 %v1006
        %1025 = vmatprep.subr.bf16.mxu0 0
        %1026 = vmatpush1.bf16.msra.mxu0 %v1007
        %1027 = vmatprep.subr.bf16.mxu0 0
        %1028 = vmatpush1.bf16.msra.mxu0 %v1008
        %1029 = vmatprep.subr.bf16.mxu0 0
        %1030 = vmatpush1.bf16.msra.mxu0 %v1009
        %1031 = vmatprep.subr.bf16.mxu0 0
        %1032 = vmatpush1.bf16.msra.mxu0 %v1010
        %1033 = vmatprep.subr.bf16.mxu0 0
        %1034 = vmatpush1.bf16.msra.mxu0 %v1011
        %1035 = vmatprep.subr.bf16.mxu0 0
        %1036 = vmatpush1.bf16.msra.mxu0 %v1012
        %1037 = vmatprep.subr.bf16.mxu0 0
        %1038 = vmatpush1.bf16.msra.mxu0 0
        %1039 = vmatprep.subr.bf16.mxu0 0
        %1040 = vmatpush1.bf16.msra.mxu0 0
        %1041 = vmatprep.subr.bf16.mxu0 0
        %1042 = vmatpush1.bf16.msra.mxu0 0
        %1043 = vmatprep.subr.bf16.mxu0 0
        %1044 = vmatpush1.bf16.msra.mxu0 0
        %1045 = vmatprep.subr.bf16.mxu0 0
        %1046 = vmatpush1.bf16.msra.mxu0 0
        %1047 = vmatprep.subr.bf16.mxu0 0
        %1048 = vmatpush1.bf16.msra.mxu0 0
        %1049 = vmatprep.subr.bf16.mxu0 0
        %1050 = vmatpush1.bf16.msra.mxu0 0
        %1051 = vmatprep.subr.bf16.mxu0 0
        %1052 = vmatpush1.bf16.msra.mxu0 0
        %1053 = vmatprep.mubr.bf16.mxu0 0
        %1054 = vmatmul.mubr.bf16.gmra.mrb[0].mxu0 %v949
        %v1055 = vpop.f32.mrb[0].mxu0
        %v1056 = vadd.f32 %v971, %v1055
        %v1057 = vpop.f32.mrb[0].mxu0
        %v1058 = vpop.f32.mrb[0].mxu0
        %v1059 = vadd.f32 %v971, %v1058
        %v1060 = vpop.f32.mrb[0].mxu0
        %1061 = vdwg.mxu0
        %v1062 = vmax.f32 %v1056, 0.0
        %v1063 = vmax.f32 %v1059, 0.0
        %v1064 = vpack.c.bf16 %v1063, %v1062
        %v1065 = vld [vmem:[%s578] sm:$0xf]
        %v1066 = vld [vmem:[%s578 + $0x4] sm:$0xf]
        %v1067 = vld [vmem:[%s578 + $0x8] sm:$0xf]
        %v1068 = vld [vmem:[%s578 + $0xc] sm:$0xf]
        %v1069 = vld [vmem:[%s578 + $0x10] sm:$0xf]
        %v1070 = vld [vmem:[%s578 + $0x14] sm:$0xf]
        %v1071 = vld [vmem:[%s578 + $0x18] sm:$0xf]
        %v1072 = vld [vmem:[%s578 + $0x1c] sm:$0xf]
        %v1073 = vld [vmem:[%s578 + $0x20] sm:$0xf]
        %v1074 = vld [vmem:[%s578 + $0x24] sm:$0xf]
        %v1075 = vld [vmem:[%s578 + $0x28] sm:$0xf]
        %v1076 = vld [vmem:[%s578 + $0x2c] sm:$0xf]
        %v1077 = vld [vmem:[%s578 + $0x30] sm:$0xf]
        %v1078 = vld [vmem:[%s578 + $0x34] sm:$0xf]
        %v1079 = vld [vmem:[%s578 + $0x38] sm:$0xf]
        %v1080 = vld [vmem:[%s578 + $0x3c] sm:$0xf]
        %v1081 = vld [vmem:[%s752] sm:$0x1]
        %v1083 = vlaneseq
        %v1084 = vshrl.u32 %v1083, 7
        %v1085 = vsub.s32 0, %v1084
        %v1086 = vrot.slane %v1081, %v1085
        %v1104 = vunpack.c.l.b16 %v1065
        %v1105 = vunpack.c.l.b16 %v1066
        %v1106 = vunpack.c.l.b16 %v1067
        %v1107 = vunpack.c.l.b16 %v1068
        %v1108 = vunpack.c.l.b16 %v1069
        %v1109 = vunpack.c.l.b16 %v1070
        %v1110 = vunpack.c.l.b16 %v1071
        %v1111 = vunpack.c.l.b16 %v1072
        %v1112 = vunpack.c.l.b16 %v1073
        %v1113 = vunpack.c.l.b16 %v1074
        %v1114 = vunpack.c.l.b16 %v1075
        %v1115 = vunpack.c.l.b16 %v1076
        %v1116 = vunpack.c.l.b16 %v1077
        %v1117 = vunpack.c.l.b16 %v1078
        %v1118 = vunpack.c.l.b16 %v1079
        %v1119 = vunpack.c.l.b16 %v1080
        %v1120 = vpack.c.b16 %v1105, %v1104
        %v1121 = vpack.c.b16 %v1107, %v1106
        %v1122 = vpack.c.b16 %v1109, %v1108
        %v1123 = vpack.c.b16 %v1111, %v1110
        %v1124 = vpack.c.b16 %v1113, %v1112
        %v1125 = vpack.c.b16 %v1115, %v1114
        %v1126 = vpack.c.b16 %v1117, %v1116
        %v1127 = vpack.c.b16 %v1119, %v1118
        %1136 = vmatprep.subr.bf16.mxu0 0
        %1137 = vmatpush1.bf16.msra.mxu0 %v1120
        %1138 = vmatprep.subr.bf16.mxu0 0
        %1139 = vmatpush1.bf16.msra.mxu0 %v1121
        %1140 = vmatprep.subr.bf16.mxu0 0
        %1141 = vmatpush1.bf16.msra.mxu0 %v1122
        %1142 = vmatprep.subr.bf16.mxu0 0
        %1143 = vmatpush1.bf16.msra.mxu0 %v1123
        %1144 = vmatprep.subr.bf16.mxu0 0
        %1145 = vmatpush1.bf16.msra.mxu0 %v1124
        %1146 = vmatprep.subr.bf16.mxu0 0
        %1147 = vmatpush1.bf16.msra.mxu0 %v1125
        %1148 = vmatprep.subr.bf16.mxu0 0
        %1149 = vmatpush1.bf16.msra.mxu0 %v1126
        %1150 = vmatprep.subr.bf16.mxu0 0
        %1151 = vmatpush1.bf16.msra.mxu0 %v1127
        %1152 = vmatprep.subr.bf16.mxu0 0
        %1153 = vmatpush1.bf16.msra.mxu0 0
        %1154 = vmatprep.subr.bf16.mxu0 0
        %1155 = vmatpush1.bf16.msra.mxu0 0
        %1156 = vmatprep.subr.bf16.mxu0 0
        %1157 = vmatpush1.bf16.msra.mxu0 0
        %1158 = vmatprep.subr.bf16.mxu0 0
        %1159 = vmatpush1.bf16.msra.mxu0 0
        %1160 = vmatprep.subr.bf16.mxu0 0
        %1161 = vmatpush1.bf16.msra.mxu0 0
        %1162 = vmatprep.subr.bf16.mxu0 0
        %1163 = vmatpush1.bf16.msra.mxu0 0
        %1164 = vmatprep.subr.bf16.mxu0 0
        %1165 = vmatpush1.bf16.msra.mxu0 0
        %1166 = vmatprep.subr.bf16.mxu0 0
        %1167 = vmatpush1.bf16.msra.mxu0 0
        %1168 = vmatprep.mubr.bf16.mxu0 0
        %1169 = vmatmul.mubr.bf16.gmra.mrb[0].mxu0 %v1064
        %v1170 = vpop.f32.mrb[0].mxu0
        %v1171 = vadd.f32 %v1086, %v1170
        %v1172 = vpop.f32.mrb[0].mxu0
        %v1173 = vpop.f32.mrb[0].mxu0
        %v1174 = vadd.f32 %v1086, %v1173
        %v1175 = vpop.f32.mrb[0].mxu0
        %1176 = vdwg.mxu0
        %v1177 = vpack.c.bf16 %v1174, %v1171
        %v1179 = vunpack.c.l.b16 %v1177
        %v1180 = vunpack.c.h.b16 %v1177
        %v1181 = vpack.c.b16 %v1179, %v1179
        %v1182 = vpack.c.b16 %v1180, %v1180
        %1185 = vst [vmem:[%s762] sm:$0xf] %v1181
        %1186 = vst [vmem:[%s762 + $0x4] sm:$0xf] %v1182
        %s1187 = smul.u32 2, %s26
        %p1188 = scmp.lt.s32.totalorder %s1187, 5
        %s1189 = scalar_select %p1188, %s1187, 5
        %s1190 = smul.addr %s1189, 4
        %s1191 = scalar_lea.vmem %s9, %s1190
        // Predicated region
        $region69: #{_fused_forward.1} parent=55 // pred_check
          %p1192 = pneg %p358
        $region70: #{_fused_forward.1} parent=55 // pred_check_branch
          %1194 = sbr.rel (%p1192) target = $region72
        $region71: #{_fused_forward.1} parent=55 // pred_region
          %s1195 = smul.u32 2, %s26
        $region72: #{_fused_forward.1} parent=55 // pred_fallthru
          _
      $region56: #{_fused_forward.1} parent=5 // pred_fallthru
        _
      %p1196 = scmp.le.s32.totalorder 2, %s21
      // Predicated region
      $region73: #{_fused_forward.1} parent=5 // pred_check
        %p1197 = pneg %p1196
      $region74: #{_fused_forward.1} parent=5 // pred_check_branch
        %1199 = sbr.rel (%p1197) target = $region76
      $region75: #{_fused_forward.1} parent=5 // pred_region
        %s1200 = ssub.s32 %s21, 2
        // Predicated region
        $region77: #{_fused_forward.1} parent=75 // pred_check
          %p1201 = pneg %p364
        $region78: #{_fused_forward.1} parent=75 // pred_check_branch
          %1203 = sbr.rel (%p1201) target = $region80
        $region79: #{_fused_forward.1} parent=75 // pred_region
          %s1204 = smul.u32 2, %s27
          %p1205 = scmp.lt.s32.totalorder %s1204, 5
          %s1206 = scalar_select %p1205, %s1204, 5
          %s1207 = smul.addr %s1206, 4
          %s1208 = scalar_lea.vmem %s9, %s1207
        $region80: #{_fused_forward.1} parent=75 // pred_fallthru
          _
      $region76: #{_fused_forward.1} parent=5 // pred_fallthru
        _
    $region6: #{_fused_forward.1} parent=1 // loop_footer
      %s25 = sadd.s32 1, %s21
    $region7: #{_fused_forward.1} parent=1 // loop_footer_branch
      %20 = sbr.rel target = $region3
    $region8: #{_fused_forward.1} parent=1 // loop_exit
      _
    %1209 = vsyncpa [#allocation3], 1
    %s1210 = scalar_lea.sflag [#allocation3], 1
    %1211 = vsyncpa %s1210, 1
    %1212 = vsyncpa [#allocation5], 1
    %s1213 = scalar_lea.sflag [#allocation5], 1
    %1214 = vsyncpa %s1213, 1

</llo_original>
